<compile_context>
chip_gen: v7x
topology: tpu7x:2x2x1
jax: 0.10.0
libtpu: 0.0.40
codegen_flags: <defaults>
</compile_context>

<pallas_src>
import math

import jax
import jax.numpy as jnp
from jax.experimental import pallas as pl
from jax.experimental.pallas import tpu as pltpu


def _round_up(a, b):
    return (a + b - 1) // b * b


def _pick_tile(dim, cap, align):
    """Largest tile <= cap that is `align`-aligned (single tile if dim small)."""
    return min(cap, _round_up(max(dim, 1), align))


def _vmem_capacity_bytes():
    try:
        return int(pltpu.get_tpu_info().vmem_capacity_bytes)
    except Exception:
        return 64 * 1024 * 1024  # conservative fallback (v7x per-TC VMEM)


def _tile_caps():
    """Generation-aware tile caps: (tm_cap, tn_cap, tk_cap, vmem_cap)."""
    vmem_cap = _vmem_capacity_bytes()
    if vmem_cap >= 100 * 1024 * 1024:       # v5e / v6e: 128 MiB VMEM
        return 512, 1024, 2048, vmem_cap
    return 512, 1024, 1024, vmem_cap        # v7x: 64 MiB physical VMEM


def _lora_kernel(x_ref, wt_ref, a_ref, bs_ref, bias_ref, o_ref, acc_ref, xa_ref):
    """Fused LoRA linear tile: grid = (M tiles, N tiles, K tiles)."""
    k = pl.program_id(2)
    nk = pl.num_programs(2)

    @pl.when(k == 0)
    def _init():
        acc_ref[...] = jnp.zeros_like(acc_ref)
        xa_ref[...] = jnp.zeros_like(xa_ref)

    x = x_ref[...]  # (tm, tk) bf16

    # Main frozen GEMM: accumulate x @ W^T in f32 on the MXU.
    acc_ref[...] += jnp.dot(x, wt_ref[...], preferred_element_type=jnp.float32)

    # LoRA first stage: xa = x @ A, accumulated over K.  Recomputed per output
    # tile (i, j) so there is no cross-N dependence -> N may run in parallel
    # across TensorCores.  Extra work is ~r_pad/tn of the main GEMM.
    xa_ref[...] += jnp.dot(x, a_ref[...], preferred_element_type=jnp.float32)

    # Epilogue at the last K step: tiny bf16 (tm, r) @ (r, tn) matmul (B is
    # already scaled by lora_alpha / r), bias add, one lane-dense store.
    @pl.when(k == nk - 1)
    def _finalize():
        lora = jnp.dot(xa_ref[...].astype(jnp.bfloat16), bs_ref[...],
                       preferred_element_type=jnp.float32)
        o_ref[...] = (acc_ref[...] + lora + bias_ref[...]).astype(o_ref.dtype)


def prepare_lora_params(weight, bias, A, B, lora_alpha):
    """One-time parameter prep: transpose/cast/pad the frozen weight, fold the
    LoRA scaling into B (stored bf16).  Do NOT call this per forward step."""
    out_f, in_f = weight.shape
    r = A.shape[-1]
    scaling = float(lora_alpha) / float(r)

    tm_cap, tn_cap, tk_cap, vmem_cap = _tile_caps()
    tn = _pick_tile(out_f, tn_cap, 128)   # lane-dense output tiles (>=128)
    tk = _pick_tile(in_f, tk_cap, 128)
    k_pad = _round_up(in_f, tk)
    n_pad = _round_up(out_f, tn)
    r_pad = max(16, _round_up(r, 16))     # bf16-sublane-aligned rank

    wt = jnp.zeros((k_pad, n_pad), jnp.bfloat16)
    wt = wt.at[:in_f, :out_f].set(weight.T.astype(jnp.bfloat16))

    a = jnp.zeros((k_pad, r_pad), jnp.bfloat16)
    a = a.at[:in_f, :r].set(A.astype(jnp.bfloat16))

    bs = jnp.zeros((r_pad, n_pad), jnp.bfloat16)
    bs = bs.at[:r, :out_f].set((B.astype(jnp.float32) * scaling).astype(jnp.bfloat16))

    if bias is None:
        bias = jnp.zeros((out_f,), jnp.float32)
    bias2d = jnp.zeros((1, n_pad), jnp.float32)
    bias2d = bias2d.at[0, :out_f].set(bias.astype(jnp.float32))

    return dict(wt=wt, a=a, bs=bs, bias=bias2d,
                in_features=in_f, out_features=out_f,
                tn=tn, tk=tk, r_pad=r_pad,
                tm_cap=tm_cap, vmem_cap=vmem_cap)


def lora_linear_forward(x, params):
    """x: (..., in_features) -> (..., out_features), in x.dtype."""
    in_f = params["in_features"]
    out_f = params["out_features"]
    tn, tk, r_pad = params["tn"], params["tk"], params["r_pad"]
    tm_cap, vmem_cap = params["tm_cap"], params["vmem_cap"]
    wt, a, bs, bias2d = params["wt"], params["a"], params["bs"], params["bias"]
    k_pad, n_pad = wt.shape

    out_dtype = x.dtype
    out_itemsize = jnp.dtype(out_dtype).itemsize

    lead = x.shape[:-1]
    M = math.prod(lead) if lead else 1
    tm = _pick_tile(M, tm_cap, 16)        # 16 = bf16 sublane packing granularity
    m_pad = _round_up(M, tm)

    x2d = x.reshape(M, in_f).astype(jnp.bfloat16)
    if (m_pad == M) and (k_pad == in_f):
        x_p = x2d                          # fast path: no padding copy
    else:
        x_p = jnp.zeros((m_pad, k_pad), jnp.bfloat16).at[:M, :in_f].set(x2d)

    grid = (m_pad // tm, n_pad // tn, k_pad // tk)
    grid_m, grid_n, grid_k = grid

    # VMEM budget for the actual double-buffered tiles + scratch (with slack).
    footprint = (2 * tm * tk * 2          # x (bf16)
                 + 2 * tk * tn * 2        # W^T (bf16)
                 + 2 * tk * r_pad * 2     # A (bf16)
                 + 2 * r_pad * tn * 2     # B*scale (bf16)
                 + 2 * 1 * tn * 4         # bias (f32)
                 + 2 * tm * tn * out_itemsize  # output
                 + tm * tn * 4            # acc scratch
                 + tm * r_pad * 4)        # xa scratch
    vmem_limit = max(int(footprint * 1.5) + (4 << 20), 16 << 20)
    vmem_limit = min(vmem_limit, vmem_cap * 3 // 4)

    # Cost hint reflecting the actual re-streaming (W^T per M tile, x per N tile).
    flops = (2 * m_pad * k_pad * n_pad
             + 2 * m_pad * k_pad * r_pad * grid_n
             + 2 * m_pad * r_pad * n_pad)
    bytes_accessed = (x_p.size * 2 * grid_n
                      + wt.size * 2 * grid_m
                      + a.size * 2 * grid_m * grid_n
                      + bs.size * 2 * grid_m
                      + bias2d.size * 4 * grid_m
                      + m_pad * n_pad * out_itemsize)

    out = pl.pallas_call(
        _lora_kernel,
        out_shape=jax.ShapeDtypeStruct((m_pad, n_pad), out_dtype),
        grid_spec=pltpu.PrefetchScalarGridSpec(
            num_scalar_prefetch=0,
            grid=grid,
            in_specs=[
                pl.BlockSpec((tm, tk), lambda i, j, k: (i, k)),       # x      (bf16)
                pl.BlockSpec((tk, tn), lambda i, j, k: (k, j)),       # W^T    (bf16)
                pl.BlockSpec((tk, r_pad), lambda i, j, k: (k, 0)),    # A      (bf16)
                pl.BlockSpec((r_pad, tn), lambda i, j, k: (0, j)),    # B*scale(bf16)
                pl.BlockSpec((1, tn), lambda i, j, k: (0, j)),        # bias   (f32)
            ],
            out_specs=pl.BlockSpec((tm, tn), lambda i, j, k: (i, j)),
            scratch_shapes=[
                pltpu.VMEM((tm, tn), jnp.float32),     # main f32 accumulator
                pltpu.VMEM((tm, r_pad), jnp.float32),  # xa = x @ A (per output tile)
            ],
        ),
        compiler_params=pltpu.CompilerParams(
            # xa is re-initialized at k==0 for every (i, j), so both M and N
            # may be sharded across TensorCores (helps v7x megacore).
            dimension_semantics=("parallel", "parallel", "arbitrary"),
            vmem_limit_bytes=int(vmem_limit),
        ),
        cost_estimate=pl.CostEstimate(
            flops=int(flops), transcendentals=0, bytes_accessed=int(bytes_accessed)),
    )(x_p, wt, a, bs, bias2d)

    if (m_pad != M) or (n_pad != out_f):
        out = out[:M, :out_f]
    return out.reshape(*lead, out_f)


if __name__ == "__main__":
    # Small shapes consistent with the module's forward.
    batch, seq = 2, 8
    in_features, out_features, r, lora_alpha = 32, 64, 4, 32

    key = jax.random.PRNGKey(0)
    k_x, k_w, k_b, k_a, k_bb = jax.random.split(key, 5)

    x = jax.random.normal(k_x, (batch, seq, in_features), dtype=jnp.float32)
    weight = jax.random.normal(k_w, (out_features, in_features), dtype=jnp.float32) * 0.05
    bias = jax.random.normal(k_b, (out_features,), dtype=jnp.float32) * 0.05
    A = jax.random.normal(k_a, (in_features, r), dtype=jnp.float32) * 0.01
    B = jax.random.normal(k_bb, (r, out_features), dtype=jnp.float32) * 0.01

    params = prepare_lora_params(weight, bias, A, B, lora_alpha=lora_alpha)
    out = lora_linear_forward(x, params)
    out = jax.block_until_ready(out)

    # Pure-JAX f32 reference of the exact PyTorch semantics.
    scaling = lora_alpha / r
    ref = x @ weight.T + bias + (x @ A @ B) * scaling
    assert out.shape == (batch, seq, out_features)
    assert out.dtype == x.dtype
    max_err = float(jnp.max(jnp.abs(out - ref)))
    # bf16 MXU operands -> loosened tolerance vs the f32 reference.
    assert jnp.allclose(out, ref, atol=3e-2, rtol=3e-2), \
        f"mismatch vs reference (max abs err {max_err})"

    print("KERNEL_OK")
</pallas_src>

<mosaic_0001>
module attributes {stable_mosaic.version = 11 : i64} {
  func.func @_lora_kernel(%arg0: i32, %arg1: i32, %arg2: i32, %arg3: memref<16x128xbf16, #tpu.memory_space<vmem>>, %arg4: memref<128x128xbf16, #tpu.memory_space<vmem>>, %arg5: memref<128x16xbf16, #tpu.memory_space<vmem>>, %arg6: memref<16x128xbf16, #tpu.memory_space<vmem>>, %arg7: memref<1x128xf32, #tpu.memory_space<vmem>>, %arg8: memref<16x128xf32, #tpu.memory_space<vmem>>, %arg9: memref<16x128xf32, #tpu.memory_space<vmem>>, %arg10: memref<16x16xf32, #tpu.memory_space<vmem>>) attributes {dimension_semantics = [#tpu.dimension_semantics<parallel>, #tpu.dimension_semantics<parallel>, #tpu.dimension_semantics<arbitrary>], iteration_bounds = array<i64: 1, 1, 1>, scalar_prefetch = 0 : i64, scratch_operands = 2 : i64, tpu.core_type = #tpu.core_type<tc>, window_params = [{transform_indices = @transform_0, window_bounds = array<i64: 16, 128>}, {transform_indices = @transform_1, window_bounds = array<i64: 128, 128>}, {transform_indices = @transform_2, window_bounds = array<i64: 128, 16>}, {transform_indices = @transform_3, window_bounds = array<i64: 16, 128>}, {transform_indices = @transform_4, window_bounds = array<i64: 1, 128>}, {transform_indices = @transform_5, window_bounds = array<i64: 16, 128>}]} {
    %c0_i32 = arith.constant 0 : i32
    %0 = arith.cmpi eq, %arg2, %c0_i32 : i32
    %1 = arith.extui %0 : i1 to i32
    %c0_i32_0 = arith.constant 0 : i32
    %2 = arith.cmpi ne, %1, %c0_i32_0 : i32
    scf.if %2 {
      %cst_17 = arith.constant 0.000000e+00 : f32
      %17 = vector.broadcast %cst_17 : f32 to vector<16x128xf32>
      %c0_18 = arith.constant 0 : index
      %c0_19 = arith.constant 0 : index
      %18 = vector.load %arg9[%c0_18, %c0_19] : memref<16x128xf32, #tpu.memory_space<vmem>>, vector<16x128xf32>
      tpu.vector_store %arg9[%c0_18, %c0_19], %17 {strides = array<i32>} : memref<16x128xf32, #tpu.memory_space<vmem>>, vector<16x128xf32>,
      %cst_20 = arith.constant 0.000000e+00 : f32
      %19 = vector.broadcast %cst_20 : f32 to vector<16x16xf32>
      %c0_21 = arith.constant 0 : index
      %c0_22 = arith.constant 0 : index
      %20 = vector.load %arg10[%c0_21, %c0_22] : memref<16x16xf32, #tpu.memory_space<vmem>>, vector<16x16xf32>
      tpu.vector_store %arg10[%c0_21, %c0_22], %19 {strides = array<i32>} : memref<16x16xf32, #tpu.memory_space<vmem>>, vector<16x16xf32>,
    } else {
    }
    %c0 = arith.constant 0 : index
    %c0_1 = arith.constant 0 : index
    %3 = vector.load %arg3[%c0, %c0_1] : memref<16x128xbf16, #tpu.memory_space<vmem>>, vector<16x128xbf16>
    %c0_2 = arith.constant 0 : index
    %c0_3 = arith.constant 0 : index
    %4 = vector.load %arg9[%c0_2, %c0_3] : memref<16x128xf32, #tpu.memory_space<vmem>>, vector<16x128xf32>
    %c0_4 = arith.constant 0 : index
    %c0_5 = arith.constant 0 : index
    %5 = vector.load %arg4[%c0_4, %c0_5] : memref<128x128xbf16, #tpu.memory_space<vmem>>, vector<128x128xbf16>
    %cst = arith.constant dense<0.000000e+00> : vector<16x128xf32>
    %6 = tpu.matmul %3, %5, %cst {dimension_numbers = #tpu.dot_dimension_numbers<[1], [0], [0], [1], [0, 0, 1, 1], [], []>} : vector<16x128xbf16>, vector<128x128xbf16>, vector<16x128xf32> -> vector<16x128xf32>
    %7 = arith.addf %4, %6 : vector<16x128xf32>
    %c0_6 = arith.constant 0 : index
    %c0_7 = arith.constant 0 : index
    %8 = vector.load %arg9[%c0_6, %c0_7] : memref<16x128xf32, #tpu.memory_space<vmem>>, vector<16x128xf32>
    tpu.vector_store %arg9[%c0_6, %c0_7], %7 {strides = array<i32>} : memref<16x128xf32, #tpu.memory_space<vmem>>, vector<16x128xf32>,
    %c0_8 = arith.constant 0 : index
    %c0_9 = arith.constant 0 : index
    %9 = vector.load %arg10[%c0_8, %c0_9] : memref<16x16xf32, #tpu.memory_space<vmem>>, vector<16x16xf32>
    %c0_10 = arith.constant 0 : index
    %c0_11 = arith.constant 0 : index
    %10 = vector.load %arg5[%c0_10, %c0_11] : memref<128x16xbf16, #tpu.memory_space<vmem>>, vector<128x16xbf16>
    %cst_12 = arith.constant dense<0.000000e+00> : vector<16x16xf32>
    %11 = tpu.matmul %3, %10, %cst_12 {dimension_numbers = #tpu.dot_dimension_numbers<[1], [0], [0], [1], [0, 0, 1, 1], [], []>} : vector<16x128xbf16>, vector<128x16xbf16>, vector<16x16xf32> -> vector<16x16xf32>
    %12 = arith.addf %9, %11 : vector<16x16xf32>
    %c0_13 = arith.constant 0 : index
    %c0_14 = arith.constant 0 : index
    %13 = vector.load %arg10[%c0_13, %c0_14] : memref<16x16xf32, #tpu.memory_space<vmem>>, vector<16x16xf32>
    tpu.vector_store %arg10[%c0_13, %c0_14], %12 {strides = array<i32>} : memref<16x16xf32, #tpu.memory_space<vmem>>, vector<16x16xf32>,
    %c0_i32_15 = arith.constant 0 : i32
    %14 = arith.cmpi eq, %arg2, %c0_i32_15 : i32
    %15 = arith.extui %14 : i1 to i32
    %c0_i32_16 = arith.constant 0 : i32
    %16 = arith.cmpi ne, %15, %c0_i32_16 : i32
    scf.if %16 {
      %c0_17 = arith.constant 0 : index
      %c0_18 = arith.constant 0 : index
      %17 = vector.load %arg10[%c0_17, %c0_18] : memref<16x16xf32, #tpu.memory_space<vmem>>, vector<16x16xf32>
      %18 = arith.truncf %17 : vector<16x16xf32> to vector<16x16xbf16>
      %c0_19 = arith.constant 0 : index
      %c0_20 = arith.constant 0 : index
      %19 = vector.load %arg6[%c0_19, %c0_20] : memref<16x128xbf16, #tpu.memory_space<vmem>>, vector<16x128xbf16>
      %cst_21 = arith.constant dense<0.000000e+00> : vector<16x128xf32>
      %20 = tpu.matmul %18, %19, %cst_21 {dimension_numbers = #tpu.dot_dimension_numbers<[1], [0], [0], [1], [0, 0, 1, 1], [], []>} : vector<16x16xbf16>, vector<16x128xbf16>, vector<16x128xf32> -> vector<16x128xf32>
      %c0_22 = arith.constant 0 : index
      %c0_23 = arith.constant 0 : index
      %21 = vector.load %arg9[%c0_22, %c0_23] : memref<16x128xf32, #tpu.memory_space<vmem>>, vector<16x128xf32>
      %22 = arith.addf %21, %20 : vector<16x128xf32>
      %c0_24 = arith.constant 0 : index
      %c0_25 = arith.constant 0 : index
      %23 = vector.load %arg7[%c0_24, %c0_25] : memref<1x128xf32, #tpu.memory_space<vmem>>, vector<1x128xf32>
      %24 = vector.broadcast %23 : vector<1x128xf32> to vector<16x128xf32>
      %25 = arith.addf %22, %24 : vector<16x128xf32>
      %c0_26 = arith.constant 0 : index
      %c0_27 = arith.constant 0 : index
      %26 = vector.load %arg8[%c0_26, %c0_27] : memref<16x128xf32, #tpu.memory_space<vmem>>, vector<16x128xf32>
      tpu.vector_store %arg8[%c0_26, %c0_27], %25 {strides = array<i32>} : memref<16x128xf32, #tpu.memory_space<vmem>>, vector<16x128xf32>,
    } else {
    }
    return
  }
  func.func @transform_0(%arg0: i32, %arg1: i32, %arg2: i32) -> (i32, i32) {
    %c0_i32 = arith.constant 0 : i32
    return %arg0, %arg2 : i32, i32
  }
  func.func @transform_1(%arg0: i32, %arg1: i32, %arg2: i32) -> (i32, i32) {
    %c0_i32 = arith.constant 0 : i32
    return %arg2, %arg1 : i32, i32
  }
  func.func @transform_2(%arg0: i32, %arg1: i32, %arg2: i32) -> (i32, i32) {
    %c0_i32 = arith.constant 0 : i32
    %c0_i32_0 = arith.constant 0 : i32
    return %arg2, %c0_i32 : i32, i32
  }
  func.func @transform_3(%arg0: i32, %arg1: i32, %arg2: i32) -> (i32, i32) {
    %c0_i32 = arith.constant 0 : i32
    %c0_i32_0 = arith.constant 0 : i32
    return %c0_i32, %arg1 : i32, i32
  }
  func.func @transform_4(%arg0: i32, %arg1: i32, %arg2: i32) -> (i32, i32) {
    %c0_i32 = arith.constant 0 : i32
    %c0_i32_0 = arith.constant 0 : i32
    return %c0_i32, %arg1 : i32, i32
  }
  func.func @transform_5(%arg0: i32, %arg1: i32, %arg2: i32) -> (i32, i32) {
    %c0_i32 = arith.constant 0 : i32
    return %arg0, %arg1 : i32, i32
  }
}

</mosaic_0001>

<llo_original>
// kernel: tpu_custom_call.1
$region0: #{tpu_custom_call.1}
  #allocation0 [shape = 'u32[]', space=smem, size = 0x4, offset = 0x4, fixed_abs, tag = 'smem constant byte address 0x4 - core index']
  #allocation1 [shape = 'u32[144,128]{1,0:T(1,128)}', space=vmem, size = 0x12000, scoped, tag = 'internal scratch']
  #allocation2 [shape = 'f32[16,128]{1,0:T(8,128)}', space=vmem, size = 0x2000, scoped, tag = 'scratch operand']
  #allocation3 [shape = 'f32[16,16]{1,0:T(8,128)}', space=vmem, size = 0x2000, scoped, tag = 'scratch operand']
  %s0 = inlined_call_operand.vmem [shape: bf16[16,128], index: 0, kind: input, shape index: {}]
  %s1 = inlined_call_operand.vmem [shape: bf16[128,128], index: 1, kind: input, shape index: {}]
  %s2 = inlined_call_operand.vmem [shape: bf16[128,16], index: 2, kind: input, shape index: {}]
  %s3 = inlined_call_operand.vmem [shape: bf16[16,128], index: 3, kind: input, shape index: {}]
  %s4 = inlined_call_operand.vmem [shape: f32[1,128], index: 4, kind: input, shape index: {}]
  %s5 = inlined_call_operand.hbm [shape: f32[16,128], index: 5, kind: output, shape index: {}]
  %s6 = sld [smem:[#allocation0]]
  $region38: #{tpu_custom_call.1} parent=0
    _
  %s8 = ssub.s32 1, %s6
  %s9 = scalar_select 0, %s8, %s6
  $region1: #{tpu_custom_call.1} parent=0
    #allocation4 [shape = 'u8[8192]{0}', space=vmem, size = 0x2000, scoped, tag = 'output window, operand 0, single buffered']
    #allocation5 [shape = 's32[1]{0}', space=sflag, size = 0x4, scoped, tag = 'scoped memory for tpu_custom_call.1']
    %10 = vsyncpa [#allocation5], 0
    // Predicated region
    $region2: #{tpu_custom_call.1} parent=1 // pred_check
      _
    $region3: #{tpu_custom_call.1} parent=1 // pred_check_branch
      %12 = sbr.rel (0) target = $region5
    $region4: #{tpu_custom_call.1} parent=1 // pred_region
      _
    $region5: #{tpu_custom_call.1} parent=1 // pred_fallthru
      _
    // Predicated region
    $region6: #{tpu_custom_call.1} parent=1 // pred_check
      _
    $region7: #{tpu_custom_call.1} parent=1 // pred_check_branch
      %14 = sbr.rel (0) target = $region9
    $region8: #{tpu_custom_call.1} parent=1 // pred_region
      _
    $region9: #{tpu_custom_call.1} parent=1 // pred_fallthru
      _
    // Predicated region
    $region10: #{tpu_custom_call.1} parent=1 // pred_check
      _
    $region11: #{tpu_custom_call.1} parent=1 // pred_check_branch
      %16 = sbr.rel (0) target = $region13
    $region12: #{tpu_custom_call.1} parent=1 // pred_region
      _
    $region13: #{tpu_custom_call.1} parent=1 // pred_fallthru
      _
    // Predicated region
    $region14: #{tpu_custom_call.1} parent=1 // pred_check
      _
    $region15: #{tpu_custom_call.1} parent=1 // pred_check_branch
      %18 = sbr.rel (0) target = $region17
    $region16: #{tpu_custom_call.1} parent=1 // pred_region
      _
    $region17: #{tpu_custom_call.1} parent=1 // pred_fallthru
      _
    // Predicated region
    $region18: #{tpu_custom_call.1} parent=1 // pred_check
      _
    $region19: #{tpu_custom_call.1} parent=1 // pred_check_branch
      %20 = sbr.rel (0) target = $region21
    $region20: #{tpu_custom_call.1} parent=1 // pred_region
      _
    $region21: #{tpu_custom_call.1} parent=1 // pred_fallthru
      _
    %p22 = scmp.eq.s32.totalorder 0, 0
    // Predicated region
    $region22: #{tpu_custom_call.1} parent=1 // pred_check
      %p23 = pneg %p22
    $region23: #{tpu_custom_call.1} parent=1 // pred_check_branch
      %25 = sbr.rel (%p23) target = $region25
    $region24: #{tpu_custom_call.1} parent=1 // pred_region
      %26 = vst [vmem:[#allocation2] sm:$0xff] 0.0
      %27 = vst [vmem:[#allocation2 + $0x8] sm:$0xff] 0.0
      %vm28 = vcmask 130048
      %29 = vst.msk [vmem:[#allocation3] sm:$0xff] %vm28, 0.0
      %30 = vst.msk [vmem:[#allocation3 + $0x8] sm:$0xff] %vm28, 0.0
    $region25: #{tpu_custom_call.1} parent=1 // pred_fallthru
      _
    %v31 = vld [vmem:[%s0] sm:$0xf]
    %v32 = vld [vmem:[%s0 + $0x4] sm:$0xf]
    %v33 = vld [vmem:[#allocation2] sm:$0xff]
    %v34 = vld [vmem:[#allocation2 + $0x8] sm:$0xff]
    %v35 = vld [vmem:[%s1] sm:$0xf]
    %v36 = vld [vmem:[%s1 + $0x4] sm:$0xf]
    %v37 = vld [vmem:[%s1 + $0x8] sm:$0xf]
    %v38 = vld [vmem:[%s1 + $0xc] sm:$0xf]
    %v39 = vld [vmem:[%s1 + $0x10] sm:$0xf]
    %v40 = vld [vmem:[%s1 + $0x14] sm:$0xf]
    %v41 = vld [vmem:[%s1 + $0x18] sm:$0xf]
    %v42 = vld [vmem:[%s1 + $0x1c] sm:$0xf]
    %v43 = vld [vmem:[%s1 + $0x20] sm:$0xf]
    %v44 = vld [vmem:[%s1 + $0x24] sm:$0xf]
    %v45 = vld [vmem:[%s1 + $0x28] sm:$0xf]
    %v46 = vld [vmem:[%s1 + $0x2c] sm:$0xf]
    %v47 = vld [vmem:[%s1 + $0x30] sm:$0xf]
    %v48 = vld [vmem:[%s1 + $0x34] sm:$0xf]
    %v49 = vld [vmem:[%s1 + $0x38] sm:$0xf]
    %v50 = vld [vmem:[%s1 + $0x3c] sm:$0xf]
    %v53 = vunpack.c.l.b16 %v31
    %v54 = vunpack.c.l.b16 %v32
    %v55 = vpack.c.b16 %v54, %v53
    %v73 = vunpack.c.l.b16 %v35
    %v74 = vunpack.c.l.b16 %v36
    %v75 = vunpack.c.l.b16 %v37
    %v76 = vunpack.c.l.b16 %v38
    %v77 = vunpack.c.l.b16 %v39
    %v78 = vunpack.c.l.b16 %v40
    %v79 = vunpack.c.l.b16 %v41
    %v80 = vunpack.c.l.b16 %v42
    %v81 = vunpack.c.l.b16 %v43
    %v82 = vunpack.c.l.b16 %v44
    %v83 = vunpack.c.l.b16 %v45
    %v84 = vunpack.c.l.b16 %v46
    %v85 = vunpack.c.l.b16 %v47
    %v86 = vunpack.c.l.b16 %v48
    %v87 = vunpack.c.l.b16 %v49
    %v88 = vunpack.c.l.b16 %v50
    %v89 = vpack.c.b16 %v74, %v73
    %v90 = vpack.c.b16 %v76, %v75
    %v91 = vpack.c.b16 %v78, %v77
    %v92 = vpack.c.b16 %v80, %v79
    %v93 = vpack.c.b16 %v82, %v81
    %v94 = vpack.c.b16 %v84, %v83
    %v95 = vpack.c.b16 %v86, %v85
    %v96 = vpack.c.b16 %v88, %v87
    %105 = vmatprep.subr.bf16.mxu0 0
    %106 = vmatpush1.bf16.msra.mxu0 %v89
    %107 = vmatprep.subr.bf16.mxu0 0
    %108 = vmatpush1.bf16.msra.mxu0 %v90
    %109 = vmatprep.subr.bf16.mxu0 0
    %110 = vmatpush1.bf16.msra.mxu0 %v91
    %111 = vmatprep.subr.bf16.mxu0 0
    %112 = vmatpush1.bf16.msra.mxu0 %v92
    %113 = vmatprep.subr.bf16.mxu0 0
    %114 = vmatpush1.bf16.msra.mxu0 %v93
    %115 = vmatprep.subr.bf16.mxu0 0
    %116 = vmatpush1.bf16.msra.mxu0 %v94
    %117 = vmatprep.subr.bf16.mxu0 0
    %118 = vmatpush1.bf16.msra.mxu0 %v95
    %119 = vmatprep.subr.bf16.mxu0 0
    %120 = vmatpush1.bf16.msra.mxu0 %v96
    %121 = vmatprep.subr.bf16.mxu0 0
    %122 = vmatpush1.bf16.msra.mxu0 0
    %123 = vmatprep.subr.bf16.mxu0 0
    %124 = vmatpush1.bf16.msra.mxu0 0
    %125 = vmatprep.subr.bf16.mxu0 0
    %126 = vmatpush1.bf16.msra.mxu0 0
    %127 = vmatprep.subr.bf16.mxu0 0
    %128 = vmatpush1.bf16.msra.mxu0 0
    %129 = vmatprep.subr.bf16.mxu0 0
    %130 = vmatpush1.bf16.msra.mxu0 0
    %131 = vmatprep.subr.bf16.mxu0 0
    %132 = vmatpush1.bf16.msra.mxu0 0
    %133 = vmatprep.subr.bf16.mxu0 0
    %134 = vmatpush1.bf16.msra.mxu0 0
    %135 = vmatprep.subr.bf16.mxu0 0
    %136 = vmatpush1.bf16.msra.mxu0 0
    %137 = vmatprep.mubr.bf16.mxu0 0
    %138 = vmatmul.mubr.bf16.gmra.mrb[0].mxu0 %v55
    %v139 = vpop.f32.mrb[0].mxu0
    %v140 = vadd.f32 0.0, %v139
    %v141 = vpop.f32.mrb[0].mxu0
    %v142 = vpop.f32.mrb[0].mxu0
    %v143 = vadd.f32 0.0, %v142
    %v144 = vpop.f32.mrb[0].mxu0
    %145 = vdwg.mxu0
    %v146 = vadd.f32 %v33, %v140
    %v147 = vadd.f32 %v34, %v143
    %148 = vst [vmem:[#allocation2] sm:$0xff] %v146
    %149 = vst [vmem:[#allocation2 + $0x8] sm:$0xff] %v147
    %v150 = vld [vmem:[#allocation3] sm:$0xff]
    %v151 = vld [vmem:[#allocation3 + $0x8] sm:$0xff]
    %v152 = vld [vmem:[%s2] sm:$0xf]
    %v153 = vld [vmem:[%s2 + $0x4] sm:$0xf]
    %v154 = vld [vmem:[%s2 + $0x8] sm:$0xf]
    %v155 = vld [vmem:[%s2 + $0xc] sm:$0xf]
    %v156 = vld [vmem:[%s2 + $0x10] sm:$0xf]
    %v157 = vld [vmem:[%s2 + $0x14] sm:$0xf]
    %v158 = vld [vmem:[%s2 + $0x18] sm:$0xf]
    %v159 = vld [vmem:[%s2 + $0x1c] sm:$0xf]
    %v160 = vld [vmem:[%s2 + $0x20] sm:$0xf]
    %v161 = vld [vmem:[%s2 + $0x24] sm:$0xf]
    %v162 = vld [vmem:[%s2 + $0x28] sm:$0xf]
    %v163 = vld [vmem:[%s2 + $0x2c] sm:$0xf]
    %v164 = vld [vmem:[%s2 + $0x30] sm:$0xf]
    %v165 = vld [vmem:[%s2 + $0x34] sm:$0xf]
    %v166 = vld [vmem:[%s2 + $0x38] sm:$0xf]
    %v167 = vld [vmem:[%s2 + $0x3c] sm:$0xf]
    %v184 = vunpack.c.l.b16 %v152
    %v185 = vunpack.c.l.b16 %v153
    %v186 = vunpack.c.l.b16 %v154
    %v187 = vunpack.c.l.b16 %v155
    %v188 = vunpack.c.l.b16 %v156
    %v189 = vunpack.c.l.b16 %v157
    %v190 = vunpack.c.l.b16 %v158
    %v191 = vunpack.c.l.b16 %v159
    %v192 = vunpack.c.l.b16 %v160
    %v193 = vunpack.c.l.b16 %v161
    %v194 = vunpack.c.l.b16 %v162
    %v195 = vunpack.c.l.b16 %v163
    %v196 = vunpack.c.l.b16 %v164
    %v197 = vunpack.c.l.b16 %v165
    %v198 = vunpack.c.l.b16 %v166
    %v199 = vunpack.c.l.b16 %v167
    %v200 = vpack.c.b16 %v185, %v184
    %v201 = vpack.c.b16 %v187, %v186
    %v202 = vpack.c.b16 %v189, %v188
    %v203 = vpack.c.b16 %v191, %v190
    %v204 = vpack.c.b16 %v193, %v192
    %v205 = vpack.c.b16 %v195, %v194
    %v206 = vpack.c.b16 %v197, %v196
    %v207 = vpack.c.b16 %v199, %v198
    %216 = vmatprep.subr.bf16.mxu0 0
    %217 = vmatpush1.bf16.msra.mxu0 %v200
    %218 = vmatprep.subr.bf16.mxu0 0
    %219 = vmatpush1.bf16.msra.mxu0 %v201
    %220 = vmatprep.subr.bf16.mxu0 0
    %221 = vmatpush1.bf16.msra.mxu0 %v202
    %222 = vmatprep.subr.bf16.mxu0 0
    %223 = vmatpush1.bf16.msra.mxu0 %v203
    %224 = vmatprep.subr.bf16.mxu0 0
    %225 = vmatpush1.bf16.msra.mxu0 %v204
    %226 = vmatprep.subr.bf16.mxu0 0
    %227 = vmatpush1.bf16.msra.mxu0 %v205
    %228 = vmatprep.subr.bf16.mxu0 0
    %229 = vmatpush1.bf16.msra.mxu0 %v206
    %230 = vmatprep.subr.bf16.mxu0 0
    %231 = vmatpush1.bf16.msra.mxu0 %v207
    %232 = vmatprep.subr.bf16.mxu0 0
    %233 = vmatpush1.bf16.msra.mxu0 0
    %234 = vmatprep.subr.bf16.mxu0 0
    %235 = vmatpush1.bf16.msra.mxu0 0
    %236 = vmatprep.subr.bf16.mxu0 0
    %237 = vmatpush1.bf16.msra.mxu0 0
    %238 = vmatprep.subr.bf16.mxu0 0
    %239 = vmatpush1.bf16.msra.mxu0 0
    %240 = vmatprep.subr.bf16.mxu0 0
    %241 = vmatpush1.bf16.msra.mxu0 0
    %242 = vmatprep.subr.bf16.mxu0 0
    %243 = vmatpush1.bf16.msra.mxu0 0
    %244 = vmatprep.subr.bf16.mxu0 0
    %245 = vmatpush1.bf16.msra.mxu0 0
    %246 = vmatprep.subr.bf16.mxu0 0
    %247 = vmatpush1.bf16.msra.mxu0 0
    %248 = vmatprep.mubr.bf16.mxu0 0
    %249 = vmatmul.mubr.bf16.gmra.mrb[0].mxu0 %v55
    %v250 = vpop.f32.mrb[0].mxu0
    %v251 = vadd.f32 0.0, %v250
    %v252 = vpop.f32.mrb[0].mxu0
    %v253 = vpop.f32.mrb[0].mxu0
    %v254 = vadd.f32 0.0, %v253
    %v255 = vpop.f32.mrb[0].mxu0
    %256 = vdwg.mxu0
    %v257 = vadd.f32 %v150, %v251
    %v258 = vadd.f32 %v151, %v254
    %vm259 = vcmask 130048
    %260 = vst.msk [vmem:[#allocation3] sm:$0xff] %vm259, %v257
    %261 = vst.msk [vmem:[#allocation3 + $0x8] sm:$0xff] %vm259, %v258
    // Predicated region
    $region26: #{tpu_custom_call.1} parent=1 // pred_check
      %p262 = pneg %p22
    $region27: #{tpu_custom_call.1} parent=1 // pred_check_branch
      %264 = sbr.rel (%p262) target = $region29
    $region28: #{tpu_custom_call.1} parent=1 // pred_region
      %v265 = vld [vmem:[#allocation3] sm:$0xff]
      %v266 = vld [vmem:[#allocation3 + $0x8] sm:$0xff]
      %v267 = vpack.c.bf16 %v266, %v265
      %v268 = vld [vmem:[%s3] sm:$0xf]
      %v269 = vld [vmem:[%s3 + $0x4] sm:$0xf]
      %v272 = vunpack.c.l.b16 %v268
      %v273 = vunpack.c.l.b16 %v269
      %v274 = vpack.c.b16 %v273, %v272
      %v277 = vsel %vm259, %v267, 0
      %279 = vmatprep.subr.bf16.mxu0 0
      %280 = vmatpush1.bf16.msra.mxu0 %v274
      %281 = vmatprep.subr.bf16.mxu0 0
      %282 = vmatpush1.bf16.msra.mxu0 0
      %283 = vmatprep.subr.bf16.mxu0 0
      %284 = vmatpush1.bf16.msra.mxu0 0
      %285 = vmatprep.subr.bf16.mxu0 0
      %286 = vmatpush1.bf16.msra.mxu0 0
      %287 = vmatprep.subr.bf16.mxu0 0
      %288 = vmatpush1.bf16.msra.mxu0 0
      %289 = vmatprep.subr.bf16.mxu0 0
      %290 = vmatpush1.bf16.msra.mxu0 0
      %291 = vmatprep.subr.bf16.mxu0 0
      %292 = vmatpush1.bf16.msra.mxu0 0
      %293 = vmatprep.subr.bf16.mxu0 0
      %294 = vmatpush1.bf16.msra.mxu0 0
      %295 = vmatprep.subr.bf16.mxu0 0
      %296 = vmatpush1.bf16.msra.mxu0 0
      %297 = vmatprep.subr.bf16.mxu0 0
      %298 = vmatpush1.bf16.msra.mxu0 0
      %299 = vmatprep.subr.bf16.mxu0 0
      %300 = vmatpush1.bf16.msra.mxu0 0
      %301 = vmatprep.subr.bf16.mxu0 0
      %302 = vmatpush1.bf16.msra.mxu0 0
      %303 = vmatprep.subr.bf16.mxu0 0
      %304 = vmatpush1.bf16.msra.mxu0 0
      %305 = vmatprep.subr.bf16.mxu0 0
      %306 = vmatpush1.bf16.msra.mxu0 0
      %307 = vmatprep.subr.bf16.mxu0 0
      %308 = vmatpush1.bf16.msra.mxu0 0
      %309 = vmatprep.subr.bf16.mxu0 0
      %310 = vmatpush1.bf16.msra.mxu0 0
      %311 = vmatprep.mubr.bf16.mxu0 0
      %312 = vmatmul.mubr.bf16.gmra.mrb[0].mxu0 %v277
      %v313 = vpop.f32.mrb[0].mxu0
      %v314 = vadd.f32 0.0, %v313
      %v315 = vpop.f32.mrb[0].mxu0
      %v316 = vpop.f32.mrb[0].mxu0
      %v317 = vadd.f32 0.0, %v316
      %v318 = vpop.f32.mrb[0].mxu0
      %319 = vdwg.mxu0
      %v320 = vld [vmem:[#allocation2] sm:$0xff]
      %v321 = vld [vmem:[#allocation2 + $0x8] sm:$0xff]
      %v322 = vadd.f32 %v320, %v314
      %v323 = vadd.f32 %v321, %v317
      %v324 = vld [vmem:[%s4] sm:$0x1]
      %v326 = vlaneseq
      %v327 = vshrl.u32 %v326, 7
      %v328 = vsub.s32 0, %v327
      %v329 = vrot.slane %v324, %v328
      %v331 = vadd.f32 %v322, %v329
      %v332 = vadd.f32 %v323, %v329
      %333 = vst [vmem:[#allocation4] sm:$0xff] %v331
      %334 = vst [vmem:[#allocation4 + $0x8] sm:$0xff] %v332
    $region29: #{tpu_custom_call.1} parent=1 // pred_fallthru
      _
    // Predicated region
    $region30: #{tpu_custom_call.1} parent=1 // pred_check
      _
    $region31: #{tpu_custom_call.1} parent=1 // pred_check_branch
      %336 = sbr.rel (0) target = $region33
    $region32: #{tpu_custom_call.1} parent=1 // pred_region
      %s338 = ssub.s32 256, 256
      %339 = vsyncadd [#allocation5], %s338
      %s340 = sshll.u32 [#allocation4], 4
      %s341 = int_to_ptr.vmem [resolvable:$true] %s340
      %346 = dma.vmem_to_hbm [thread:$0]  %s341, 256, %s5, [#allocation5], 128, 128, 8
    $region33: #{tpu_custom_call.1} parent=1 // pred_fallthru
      _
    // Predicated region
    $region34: #{tpu_custom_call.1} parent=1 // pred_check
      _
    $region35: #{tpu_custom_call.1} parent=1 // pred_check_branch
      %348 = sbr.rel (0) target = $region37
    $region36: #{tpu_custom_call.1} parent=1 // pred_region
      %349 = dma.done [#allocation5], 256
    $region37: #{tpu_custom_call.1} parent=1 // pred_fallthru
      _
    %350 = vsyncpa [#allocation5], 1

</llo_original>
